<compile_context>
chip_gen: v7x
topology: tpu7x:2x2x1
jax: 0.10.0
libtpu: 0.0.40
codegen_flags: <defaults>
</compile_context>

<pallas_src>
import jax
import jax.numpy as jnp
from jax.experimental import pallas as pl
from jax.experimental.pallas import tpu as pltpu


_VMEM_BLOCK_BYTES = 2 * 1024 * 1024    # per-block budget (in+out, double-buffered ~ 8 MiB)


# ---------------- kernels ----------------

def _softmax_sublane_kernel(x_ref, o_ref):
    """Block (TILE_R, F, W): numerically-stable softmax over axis=1 (sublane axis)."""
    x = x_ref[...].astype(jnp.float32)
    m = jnp.max(x, axis=1, keepdims=True)          # (TILE_R, 1, W)  -- XLU sublane reduce
    e = jnp.exp(x - m)                             # EUP
    s = jnp.sum(e, axis=1, keepdims=True)          # (TILE_R, 1, W)  -- XLU sublane reduce
    o_ref[...] = (e * pl.reciprocal(s, approx=False)).astype(o_ref.dtype)


def _sigmoid_kernel(x_ref, o_ref):
    x = x_ref[...].astype(jnp.float32)
    o_ref[...] = pl.reciprocal(1.0 + jnp.exp(-x), approx=False).astype(o_ref.dtype)


# ---------------- tiling helpers (all trace-time / static) ----------------

def _round_up(v, m):
    return ((v + m - 1) // m) * m


def _largest_divisor_at_most(n, cap):
    cap = max(1, min(cap, n))
    for d in range(cap, 0, -1):
        if n % d == 0:
            return d
    return 1


def _pick_leading_tile(rows, padded_row_bytes):
    """Tile for the (layout-unconstrained) leading dim of a 3-D block."""
    cap = max(1, _VMEM_BLOCK_BYTES // max(1, padded_row_bytes))
    tile = _largest_divisor_at_most(rows, cap)
    # Prefer grid length >= 2 (keeps both v7x TensorCores busy), but only when it
    # does not shatter the block size.
    if tile == rows and rows > 1:
        half = _largest_divisor_at_most(rows, max(1, rows // 2))
        if half * 4 >= rows:
            tile = half
    return tile


def _pick_row_tile_2d(rows, cap):
    """Row tile for a 2-D block: must be a multiple of 8 or the full row count."""
    cap = max(1, cap)
    best_cap = min(cap, max(8, rows // 2))          # grid >= 2 when possible
    d = best_cap - (best_cap % 8)
    while d >= 8:
        if rows % d == 0:
            return d
        d -= 8
    if rows <= cap:
        return rows                                  # one full-rows block (always legal)
    return None


# ---------------- pallas_call wrappers ----------------

def _softmax_dim1_3d(x3):
    """x3: (R, F, W). Softmax over axis=1 via Pallas (single HBM pass, no transpose)."""
    R, F, W = x3.shape
    padded_row_bytes = _round_up(F, 8) * _round_up(W, 128) * 4   # VMEM footprint per leading row
    tile_r = _pick_leading_tile(R, padded_row_bytes)
    return pl.pallas_call(
        _softmax_sublane_kernel,
        out_shape=jax.ShapeDtypeStruct((R, F, W), x3.dtype),
        grid_spec=pltpu.PrefetchScalarGridSpec(
            num_scalar_prefetch=0,
            grid=(R // tile_r,),
            in_specs=[pl.BlockSpec((tile_r, F, W), lambda i: (i, 0, 0))],
            out_specs=pl.BlockSpec((tile_r, F, W), lambda i: (i, 0, 0)),
        ),
        compiler_params=pltpu.CompilerParams(
            dimension_semantics=("parallel",)),
    )(x3)


def _sigmoid_2d(x2, tile_r):
    R, L = x2.shape
    return pl.pallas_call(
        _sigmoid_kernel,
        out_shape=jax.ShapeDtypeStruct((R, L), x2.dtype),
        grid_spec=pltpu.PrefetchScalarGridSpec(
            num_scalar_prefetch=0,
            grid=(R // tile_r,),
            in_specs=[pl.BlockSpec((tile_r, L), lambda i: (i, 0))],
            out_specs=pl.BlockSpec((tile_r, L), lambda i: (i, 0)),
        ),
        compiler_params=pltpu.CompilerParams(
            dimension_semantics=("parallel",)),
    )(x2)


def _sigmoid_forward(x):
    """Elementwise sigmoid on a lane-dense flat view (last dim % 128 == 0)."""
    T = x.size
    for L in (4096, 2048, 1024, 512, 256, 128):
        if T % L != 0:
            continue
        R = T // L
        cap = max(1, _VMEM_BLOCK_BYTES // (L * 4))
        tile_r = _pick_row_tile_2d(R, cap)
        if tile_r is not None:
            y = _sigmoid_2d(x.reshape(R, L), tile_r)
            return y.reshape(x.shape)
    # TODO(synk): element count not a multiple of 128 (or no legal row tiling);
    # fall back to XLA's fused sigmoid for these rare shapes.
    return jax.nn.sigmoid(x)


# ---------------- module forward ----------------

@jax.jit
def softmax_module(x):
    """Forward pass of SoftMax. x: (N, C, F, W).

    If F > 1: softmax over dim=2 (F); else elementwise sigmoid.
    The branch resolves at trace time (shapes are static).
    """
    N, C, F, W = x.shape
    if F > 1:
        y3 = _softmax_dim1_3d(x.reshape(N * C, F, W))   # free reshape, no transpose
        return y3.reshape(N, C, F, W)
    return _sigmoid_forward(x)


# ---------------- reference + test ----------------

def _ref_forward(x):
    if x.shape[2] > 1:
        return jax.nn.softmax(x, axis=2)
    return jax.nn.sigmoid(x)


if __name__ == "__main__":
    key = jax.random.PRNGKey(0)

    # Case 1: feature dim (dim=2) > 1 -> softmax over dim=2
    x = jax.random.normal(key, (2, 4, 16, 16), dtype=jnp.float32)
    y = softmax_module(x)
    jax.block_until_ready(y)
    y_ref = _ref_forward(x)
    assert y.shape == x.shape
    assert float(jnp.max(jnp.abs(y - y_ref))) < 1e-5
    # softmax rows sum to 1 along dim=2
    assert float(jnp.max(jnp.abs(jnp.sum(y, axis=2) - 1.0))) < 1e-5

    # Case 2: feature dim == 1 -> sigmoid
    x1 = jax.random.normal(jax.random.PRNGKey(0), (2, 4, 1, 16), dtype=jnp.float32)
    y1 = softmax_module(x1)
    jax.block_until_ready(y1)
    y1_ref = _ref_forward(x1)
    assert float(jnp.max(jnp.abs(y1 - y1_ref))) < 1e-5

    print("KERNEL_OK")
</pallas_src>

<mosaic_0001>
module attributes {stable_mosaic.version = 11 : i64} {
  func.func @_softmax_sublane_kernel(%arg0: i32, %arg1: memref<4x16x16xf32, #tpu.memory_space<vmem>>, %arg2: memref<4x16x16xf32, #tpu.memory_space<vmem>>) attributes {dimension_semantics = [#tpu.dimension_semantics<parallel>], iteration_bounds = array<i64: 2>, scalar_prefetch = 0 : i64, scratch_operands = 0 : i64, tpu.core_type = #tpu.core_type<tc>, window_params = [{transform_indices = @transform_0, window_bounds = array<i64: 4, 16, 16>}, {transform_indices = @transform_1, window_bounds = array<i64: 4, 16, 16>}]} {
    %c0 = arith.constant 0 : index
    %c0_0 = arith.constant 0 : index
    %c0_1 = arith.constant 0 : index
    %0 = vector.load %arg1[%c0, %c0_0, %c0_1] : memref<4x16x16xf32, #tpu.memory_space<vmem>>, vector<4x16x16xf32>
    %cst = arith.constant dense<0xFF800000> : vector<4x16xf32>
    %1 = vector.multi_reduction <maximumf>, %0, %cst [1] : vector<4x16x16xf32> to vector<4x16xf32>
    %2 = vector.shape_cast %1 : vector<4x16xf32> to vector<4x1x16xf32>
    %3 = vector.broadcast %2 : vector<4x1x16xf32> to vector<4x16x16xf32>
    %4 = arith.subf %0, %3 : vector<4x16x16xf32>
    %5 = math.exp %4 : vector<4x16x16xf32>
    %cst_2 = arith.constant dense<0.000000e+00> : vector<4x16xf32>
    %6 = vector.multi_reduction <add>, %5, %cst_2 [1] : vector<4x16x16xf32> to vector<4x16xf32>
    %7 = vector.shape_cast %6 : vector<4x16xf32> to vector<4x1x16xf32>
    %8 = tpu.reciprocal %7 : vector<4x1x16xf32> -> vector<4x1x16xf32>
    %9 = vector.broadcast %8 : vector<4x1x16xf32> to vector<4x16x16xf32>
    %10 = arith.mulf %5, %9 : vector<4x16x16xf32>
    %c0_3 = arith.constant 0 : index
    %c0_4 = arith.constant 0 : index
    %c0_5 = arith.constant 0 : index
    %11 = vector.load %arg2[%c0_3, %c0_4, %c0_5] : memref<4x16x16xf32, #tpu.memory_space<vmem>>, vector<4x16x16xf32>
    tpu.vector_store %arg2[%c0_3, %c0_4, %c0_5], %10 {strides = array<i32>} : memref<4x16x16xf32, #tpu.memory_space<vmem>>, vector<4x16x16xf32>,
    return
  }
  func.func @transform_0(%arg0: i32) -> (i32, i32, i32) {
    %c0_i32 = arith.constant 0 : i32
    %c0_i32_0 = arith.constant 0 : i32
    %c0_i32_1 = arith.constant 0 : i32
    return %arg0, %c0_i32, %c0_i32_0 : i32, i32, i32
  }
  func.func @transform_1(%arg0: i32) -> (i32, i32, i32) {
    %c0_i32 = arith.constant 0 : i32
    %c0_i32_0 = arith.constant 0 : i32
    %c0_i32_1 = arith.constant 0 : i32
    return %arg0, %c0_i32, %c0_i32_0 : i32, i32, i32
  }
}

</mosaic_0001>

<llo_original>
// kernel: softmax_module.1
$region0: #{softmax_module.1}
  #allocation0 [shape = 'u32[]', space=smem, size = 0x4, offset = 0x4, fixed_abs, tag = 'smem constant byte address 0x4 - core index']
  #allocation1 [shape = 'u32[144,128]{1,0:T(1,128)}', space=vmem, size = 0x12000, scoped, tag = 'internal scratch']
  %s0 = inlined_call_operand.hbm [shape: f32[8,16,16], index: 0, kind: input, shape index: {}]
  %s1 = inlined_call_operand.hbm [shape: f32[8,16,16], index: 1, kind: output, shape index: {}]
  %s2 = sld [smem:[#allocation0]]
  $region41: #{softmax_module.1} parent=0
    _
  %s4 = ssub.s32 1, %s2
  %s5 = scalar_select 0, %s4, %s2
  $region1: #{softmax_module.1} parent=0
    #allocation2 [shape = 'u8[65536]{0}', space=vmem, size = 0x10000, scoped, tag = 'input window, operand 0']
    #allocation3 [shape = 's32[2]{0}', space=sflag, size = 0x8, scoped, tag = 'scoped memory for softmax_module.1']
    #allocation4 [shape = 's32[2]{0}', space=sflag, size = 0x8, scoped, tag = 'scoped memory for softmax_module.1']
    #allocation5 [shape = 'u8[65536]{0}', space=vmem, size = 0x10000, scoped, tag = 'output window, operand 0']
    %6 = vsyncpa [#allocation3], 0
    %s7 = scalar_lea.sflag [#allocation3], 1
    %8 = vsyncpa %s7, 0
    %9 = vsyncpa [#allocation4], 0
    %s10 = scalar_lea.sflag [#allocation4], 1
    %11 = vsyncpa %s10, 0
    loop: start=0, step=1, limit=4
    $region2: #{softmax_module.1} parent=1 // loop_pre_header
      _
    $region3: #{softmax_module.1} parent=1 // loop_header
      %s13 = sphi 0, %s17
      %p14 = scmp.ge.s32.totalorder %s13, 4
      %s23 = sphi 0, %s25
      %s26 = sphi 0, %s23
      %s27 = sphi 0, %s26
      %s43 = sphi 0, %s27
      %s49 = sphi 0, %s51
      %s52 = sphi 0, %s49
      %s53 = sphi 0, %s52
      %s69 = sphi 0, %s53
    $region4: #{softmax_module.1} parent=1 // loop_header_branch
      %16 = sbr.rel (%p14) target = $region8
    $region5: #{softmax_module.1} parent=1 // loop_body
      %s18 = ssub.s32 %s13, 1
      %s19 = ssub.s32 %s13, 2
      %s20 = sadd.s32 %s13, 1
      %s21 = ssub.s32 %s13, %s20
      %p22 = scmp.eq.s32.totalorder %s21, 0
      %s24 = sadd.s32 %s23, 1
      %s25 = scalar_select %p22, %s23, %s24
      %p28 = pneg %p22
      %p29 = scmp.eq.s32.totalorder %s13, 1
      %p30 = por %p28, %p29
      %p31 = scmp.ne.s32.totalorder %s23, %s26
      %p32 = scmp.eq.s32.totalorder %s13, 0
      %p33 = por %p31, %p32
      %p34 = scmp.ne.s32.totalorder %s23, %s26
      %p35 = scmp.eq.s32.totalorder %s18, 1
      %p36 = por %p34, %p35
      %p37 = scmp.ne.s32.totalorder %s26, %s27
      %p38 = scmp.eq.s32.totalorder %s18, 0
      %p39 = por %p37, %p38
      %p40 = scmp.ne.s32.totalorder %s26, %s27
      %p41 = scmp.eq.s32.totalorder %s19, 1
      %p42 = por %p40, %p41
      %p44 = scmp.ne.s32.totalorder %s27, %s43
      %p45 = scmp.eq.s32.totalorder %s19, 0
      %p46 = por %p44, %p45
      %s47 = ssub.s32 %s13, %s20
      %p48 = scmp.eq.s32.totalorder %s47, 0
      %s50 = sadd.s32 %s49, 1
      %s51 = scalar_select %p48, %s49, %s50
      %p54 = pneg %p48
      %p55 = scmp.eq.s32.totalorder %s13, 1
      %p56 = por %p54, %p55
      %p57 = scmp.ne.s32.totalorder %s49, %s52
      %p58 = scmp.eq.s32.totalorder %s13, 0
      %p59 = por %p57, %p58
      %p60 = scmp.ne.s32.totalorder %s49, %s52
      %p61 = scmp.eq.s32.totalorder %s18, 1
      %p62 = por %p60, %p61
      %p63 = scmp.ne.s32.totalorder %s52, %s53
      %p64 = scmp.eq.s32.totalorder %s18, 0
      %p65 = por %p63, %p64
      %p66 = scmp.ne.s32.totalorder %s52, %s53
      %p67 = scmp.eq.s32.totalorder %s19, 1
      %p68 = por %p66, %p67
      %p70 = scmp.ne.s32.totalorder %s53, %s69
      %p71 = scmp.eq.s32.totalorder %s19, 0
      %p72 = por %p70, %p71
      %p73 = scmp.le.s32.totalorder 1, %s13
      %p74 = scmp.lt.s32.totalorder %s13, 3
      %p75 = pnand %p73, %p74
      %p76 = pneg %p75
      // Predicated region
      $region9: #{softmax_module.1} parent=5 // pred_check
        _
      $region10: #{softmax_module.1} parent=5 // pred_check_branch
        %78 = sbr.rel (%p75) target = $region12
      $region11: #{softmax_module.1} parent=5 // pred_region
        %s79 = ssub.s32 %s13, 1
      $region12: #{softmax_module.1} parent=5 // pred_fallthru
        _
      %p80 = scmp.lt.s32.totalorder %s13, 2
      // Predicated region
      $region13: #{softmax_module.1} parent=5 // pred_check
        %p81 = pneg %p80
      $region14: #{softmax_module.1} parent=5 // pred_check_branch
        %83 = sbr.rel (%p81) target = $region16
      $region15: #{softmax_module.1} parent=5 // pred_region
        // Predicated region
        $region17: #{softmax_module.1} parent=15 // pred_check
          %p84 = pneg %p33
        $region18: #{softmax_module.1} parent=15 // pred_check_branch
          %86 = sbr.rel (%p84) target = $region20
        $region19: #{softmax_module.1} parent=15 // pred_region
          %s87 = sand.u32 %s23, 1
          %s88 = scalar_lea.sflag [#allocation3], %s87
          %s89 = sand.u32 %s23, 1
          %s90 = smul.addr %s89, 64
          %s91 = scalar_lea.vmem [#allocation2], %s90
          %s92 = smul.u32 4, %s13
          %s94 = ssub.s32 1024, 1024
          %95 = vsyncadd %s88, %s94
          %s96 = smul.addr %s92, 2
          %s97 = smul.addr %s96, 128
          %s98 = scalar_lea.hbm %s0, %s97
          %s99 = sshll.u32 %s91, 4
          %s100 = int_to_ptr.vmem [resolvable:$true] %s99
          %105 = dma.hbm_to_vmem [thread:$0]  %s98, 1024, %s100, %s88, 128, 128, 8
        $region20: #{softmax_module.1} parent=15 // pred_fallthru
          _
      $region16: #{softmax_module.1} parent=5 // pred_fallthru
        _
      %p106 = scmp.le.s32.totalorder 1, %s13
      %p107 = scmp.lt.s32.totalorder %s13, 3
      %p108 = pnand %p106, %p107
      %p109 = pneg %p108
      // Predicated region
      $region21: #{softmax_module.1} parent=5 // pred_check
        _
      $region22: #{softmax_module.1} parent=5 // pred_check_branch
        %111 = sbr.rel (%p108) target = $region24
      $region23: #{softmax_module.1} parent=5 // pred_region
        %s112 = ssub.s32 %s13, 1
        %s113 = sand.u32 %s26, 1
        %s114 = scalar_lea.sflag [#allocation3], %s113
        %s115 = sand.u32 %s26, 1
        %s116 = smul.addr %s115, 64
        %s117 = scalar_lea.vmem [#allocation2], %s116
        // Predicated region
        $region25: #{softmax_module.1} parent=23 // pred_check
          %p118 = pneg %p39
        $region26: #{softmax_module.1} parent=23 // pred_check_branch
          %120 = sbr.rel (%p118) target = $region28
        $region27: #{softmax_module.1} parent=23 // pred_region
          %121 = dma.done %s114, 1024
        $region28: #{softmax_module.1} parent=23 // pred_fallthru
          _
        %s122 = sand.u32 %s26, 1
        %s123 = scalar_lea.sflag [#allocation3], %s122
        %s124 = sand.u32 %s26, 1
        %s125 = smul.addr %s124, 64
        %s126 = scalar_lea.vmem [#allocation2], %s125
        %p127 = pneg %p39
        %p128 = pneg %p36
        %p129 = pneg %p65
        %p130 = pneg %p62
        %s131 = sand.u32 %s52, 1
        %s132 = scalar_lea.sflag [#allocation4], %s131
        %s133 = sand.u32 %s52, 1
        %s134 = smul.addr %s133, 64
        %s135 = scalar_lea.vmem [#allocation5], %s134
        %s136 = smul.u32 4, %s18
        %s137 = smul.u32 4, %s18
        %v138 = vld [vmem:[%s117] sm:$0xff]
        %v139 = vld [vmem:[%s117 + $0x8] sm:$0xff]
        %v140 = vld [vmem:[%s117 + $0x10] sm:$0xff]
        %v141 = vld [vmem:[%s117 + $0x18] sm:$0xff]
        %v142 = vld [vmem:[%s117 + $0x20] sm:$0xff]
        %v143 = vld [vmem:[%s117 + $0x28] sm:$0xff]
        %v144 = vld [vmem:[%s117 + $0x30] sm:$0xff]
        %v145 = vld [vmem:[%s117 + $0x38] sm:$0xff]
        %vm146 = vcmask 130048
        %v147 = vsel %vm146, %v138, -inf
        %v148 = vsel %vm146, %v139, -inf
        %v149 = vmax.f32 %v147, %v148
        %v150 = vrot.slane %v149, 4
        %v151 = vmax.f32 %v149, %v150
        %v152 = vrot.slane %v151, 2
        %v153 = vmax.f32 %v151, %v152
        %v154 = vrot.slane %v153, 1
        %v155 = vmax.f32 %v153, %v154
        %v156 = vsel %vm146, %v140, -inf
        %v157 = vsel %vm146, %v141, -inf
        %v158 = vmax.f32 %v156, %v157
        %v159 = vrot.slane %v158, 4
        %v160 = vmax.f32 %v158, %v159
        %v161 = vrot.slane %v160, 2
        %v162 = vmax.f32 %v160, %v161
        %v163 = vrot.slane %v162, 1
        %v164 = vmax.f32 %v162, %v163
        %v165 = vsel %vm146, %v142, -inf
        %v166 = vsel %vm146, %v143, -inf
        %v167 = vmax.f32 %v165, %v166
        %v168 = vrot.slane %v167, 4
        %v169 = vmax.f32 %v167, %v168
        %v170 = vrot.slane %v169, 2
        %v171 = vmax.f32 %v169, %v170
        %v172 = vrot.slane %v171, 1
        %v173 = vmax.f32 %v171, %v172
        %v174 = vsel %vm146, %v144, -inf
        %v175 = vsel %vm146, %v145, -inf
        %v176 = vmax.f32 %v174, %v175
        %v177 = vrot.slane %v176, 4
        %v178 = vmax.f32 %v176, %v177
        %v179 = vrot.slane %v178, 2
        %v180 = vmax.f32 %v178, %v179
        %v181 = vrot.slane %v180, 1
        %v182 = vmax.f32 %v180, %v181
        %v183 = vsub.f32 %v138, %v155
        %v184 = vsub.f32 %v139, %v155
        %v185 = vsub.f32 %v140, %v164
        %v186 = vsub.f32 %v141, %v164
        %v187 = vsub.f32 %v142, %v173
        %v188 = vsub.f32 %v143, %v173
        %v189 = vsub.f32 %v144, %v182
        %v190 = vsub.f32 %v145, %v182
        %v191 = vmul.f32 %v183, 1.442695
        %v192 = vpow.pop %v191
        %v193 = vmul.f32 %v184, 1.442695
        %v194 = vpow.pop %v193
        %v195 = vmul.f32 %v185, 1.442695
        %v196 = vpow.pop %v195
        %v197 = vmul.f32 %v186, 1.442695
        %v198 = vpow.pop %v197
        %v199 = vmul.f32 %v187, 1.442695
        %v200 = vpow.pop %v199
        %v201 = vmul.f32 %v188, 1.442695
        %v202 = vpow.pop %v201
        %v203 = vmul.f32 %v189, 1.442695
        %v204 = vpow.pop %v203
        %v205 = vmul.f32 %v190, 1.442695
        %v206 = vpow.pop %v205
        %v207 = vsel %vm146, %v192, 0.0
        %v208 = vsel %vm146, %v194, 0.0
        %v209 = vadd.f32 %v207, %v208
        %v210 = vrot.slane %v209, 4
        %v211 = vadd.f32 %v209, %v210
        %v212 = vrot.slane %v211, 2
        %v213 = vadd.f32 %v211, %v212
        %v214 = vrot.slane %v213, 1
        %v215 = vadd.f32 %v213, %v214
        %v216 = vsel %vm146, %v196, 0.0
        %v217 = vsel %vm146, %v198, 0.0
        %v218 = vadd.f32 %v216, %v217
        %v219 = vrot.slane %v218, 4
        %v220 = vadd.f32 %v218, %v219
        %v221 = vrot.slane %v220, 2
        %v222 = vadd.f32 %v220, %v221
        %v223 = vrot.slane %v222, 1
        %v224 = vadd.f32 %v222, %v223
        %v225 = vsel %vm146, %v200, 0.0
        %v226 = vsel %vm146, %v202, 0.0
        %v227 = vadd.f32 %v225, %v226
        %v228 = vrot.slane %v227, 4
        %v229 = vadd.f32 %v227, %v228
        %v230 = vrot.slane %v229, 2
        %v231 = vadd.f32 %v229, %v230
        %v232 = vrot.slane %v231, 1
        %v233 = vadd.f32 %v231, %v232
        %v234 = vsel %vm146, %v204, 0.0
        %v235 = vsel %vm146, %v206, 0.0
        %v236 = vadd.f32 %v234, %v235
        %v237 = vrot.slane %v236, 4
        %v238 = vadd.f32 %v236, %v237
        %v239 = vrot.slane %v238, 2
        %v240 = vadd.f32 %v238, %v239
        %v241 = vrot.slane %v240, 1
        %v242 = vadd.f32 %v240, %v241
        %v243 = vrcp.pop %v215
        %v244 = vrcp.pop %v224
        %v245 = vrcp.pop %v233
        %v246 = vrcp.pop %v242
        %v247 = vmul.f32 %v192, %v243
        %v248 = vmul.f32 %v194, %v243
        %v249 = vmul.f32 %v196, %v244
        %v250 = vmul.f32 %v198, %v244
        %v251 = vmul.f32 %v200, %v245
        %v252 = vmul.f32 %v202, %v245
        %v253 = vmul.f32 %v204, %v246
        %v254 = vmul.f32 %v206, %v246
        %255 = vst.msk [vmem:[%s135] sm:$0xff] %vm146, %v247
        %256 = vst.msk [vmem:[%s135 + $0x8] sm:$0xff] %vm146, %v248
        %257 = vst.msk [vmem:[%s135 + $0x10] sm:$0xff] %vm146, %v249
        %258 = vst.msk [vmem:[%s135 + $0x18] sm:$0xff] %vm146, %v250
        %259 = vst.msk [vmem:[%s135 + $0x20] sm:$0xff] %vm146, %v251
        %260 = vst.msk [vmem:[%s135 + $0x28] sm:$0xff] %vm146, %v252
        %261 = vst.msk [vmem:[%s135 + $0x30] sm:$0xff] %vm146, %v253
        %262 = vst.msk [vmem:[%s135 + $0x38] sm:$0xff] %vm146, %v254
        %s263 = sand.u32 %s52, 1
        %s264 = scalar_lea.sflag [#allocation4], %s263
        %s265 = sand.u32 %s52, 1
        %s266 = smul.addr %s265, 64
        %s267 = scalar_lea.vmem [#allocation5], %s266
        // Predicated region
        $region29: #{softmax_module.1} parent=23 // pred_check
          %p268 = pneg %p62
        $region30: #{softmax_module.1} parent=23 // pred_check_branch
          %270 = sbr.rel (%p268) target = $region32
        $region31: #{softmax_module.1} parent=23 // pred_region
          %s271 = smul.u32 4, %s18
          %s273 = ssub.s32 1024, 1024
          %274 = vsyncadd %s264, %s273
          %s275 = smul.addr %s271, 2
          %s276 = smul.addr %s275, 128
          %s277 = scalar_lea.hbm %s1, %s276
          %s278 = sshll.u32 %s267, 4
          %s279 = int_to_ptr.vmem [resolvable:$true] %s278
          %284 = dma.vmem_to_hbm [thread:$0]  %s279, 1024, %s277, %s264, 128, 128, 8
        $region32: #{softmax_module.1} parent=23 // pred_fallthru
          _
      $region24: #{softmax_module.1} parent=5 // pred_fallthru
        _
      %p285 = scmp.le.s32.totalorder 2, %s13
      // Predicated region
      $region33: #{softmax_module.1} parent=5 // pred_check
        %p286 = pneg %p285
      $region34: #{softmax_module.1} parent=5 // pred_check_branch
        %288 = sbr.rel (%p286) target = $region36
      $region35: #{softmax_module.1} parent=5 // pred_region
        %s289 = ssub.s32 %s13, 2
        // Predicated region
        $region37: #{softmax_module.1} parent=35 // pred_check
          %p290 = pneg %p68
        $region38: #{softmax_module.1} parent=35 // pred_check_branch
          %292 = sbr.rel (%p290) target = $region40
        $region39: #{softmax_module.1} parent=35 // pred_region
          %s293 = sand.u32 %s53, 1
          %s294 = scalar_lea.sflag [#allocation4], %s293
          %s295 = sand.u32 %s53, 1
          %s296 = smul.addr %s295, 64
          %s297 = scalar_lea.vmem [#allocation5], %s296
          %298 = dma.done %s294, 1024
        $region40: #{softmax_module.1} parent=35 // pred_fallthru
          _
      $region36: #{softmax_module.1} parent=5 // pred_fallthru
        _
    $region6: #{softmax_module.1} parent=1 // loop_footer
      %s17 = sadd.s32 1, %s13
    $region7: #{softmax_module.1} parent=1 // loop_footer_branch
      %12 = sbr.rel target = $region3
    $region8: #{softmax_module.1} parent=1 // loop_exit
      _
    %299 = vsyncpa [#allocation3], 1
    %s300 = scalar_lea.sflag [#allocation3], 1
    %301 = vsyncpa %s300, 1
    %302 = vsyncpa [#allocation4], 1
    %s303 = scalar_lea.sflag [#allocation4], 1
    %304 = vsyncpa %s303, 1

</llo_original>
